<compile_context>
chip_gen: v6e
topology: v6e:2x2x1
jax: 0.10.0
libtpu: 0.0.40
codegen_flags: <defaults>
</compile_context>

<pallas_src>
import jax
import jax.numpy as jnp
from jax.experimental import pallas as pl
from jax.experimental.pallas import tpu as pltpu

LANE = 128
SUBLANE = 8


def _round_up(n: int, m: int) -> int:
    return ((n + m - 1) // m) * m


def _pick_tb(b8: int) -> int:
    """Largest batch tile (multiple of 8) that keeps batch padding under ~10%."""
    for tb in (2048, 1024, 512, 256, 128, 64, 32, 16, 8):
        if tb <= b8 and (_round_up(b8, tb) - b8) * 10 <= b8:
            return tb
    return SUBLANE


def mlp_kernel(x_ref, w1_ref, b1_ref, w2_ref, b2_ref, o_ref):
    # Two MXU matmuls + VPU bias-add/ReLU, fused. f32 accumulation on the MXU.
    x = x_ref[...]
    h = jnp.dot(x, w1_ref[...], preferred_element_type=jnp.float32) + b1_ref[...]
    h = jnp.maximum(h, 0.0)  # ReLU (f32 on the VPU; safe on v5e which has no bf16 VPU)
    y = jnp.dot(h.astype(w2_ref.dtype), w2_ref[...],
                preferred_element_type=jnp.float32) + b2_ref[...]
    o_ref[...] = y.astype(o_ref.dtype)  # narrow (TB, N) store; N is NOT padded


def prepare_params(w1, b1, w2, b2, param_dtype=jnp.float32):
    """One-time (init-time) parameter layout prep — hoisted out of the forward.

    w1: (x_fdim2, x_fdim1), b1: (x_fdim1,), w2: (x_fdim1, ipVec_dim), b2: (ipVec_dim,)
    Hidden dim is zero-padded to a multiple of 128 (lane-dense intermediate); padded
    hidden columns stay zero through ReLU and contribute nothing to the second matmul.
    Output dim is left at its true width. For v6e/v7x pass param_dtype=jnp.bfloat16
    (MXU-native); biases stay f32 so bias-add/ReLU run in f32.
    """
    K, H = w1.shape
    N = w2.shape[1]
    H_pad = _round_up(H, LANE)
    w1p = jnp.zeros((K, H_pad), param_dtype).at[:, :H].set(w1.astype(param_dtype))
    b1p = jnp.zeros((1, H_pad), jnp.float32).at[:, :H].set(
        b1.reshape(1, H).astype(jnp.float32))
    w2p = jnp.zeros((H_pad, N), param_dtype).at[:H, :].set(w2.astype(param_dtype))
    b2p = b2.reshape(1, N).astype(jnp.float32)
    return w1p, b1p, w2p, b2p


@jax.jit
def simple_net2_forward(x, w1p, b1p, w2p, b2p):
    """x: (B, x_fdim2) -> (B, ipVec_dim). Params must come from prepare_params()."""
    B, K = x.shape
    H_pad = w1p.shape[1]
    N = w2p.shape[1]

    # Adaptive batch tile; pad batch only when necessary.
    B8 = _round_up(B, SUBLANE)
    TB = _pick_tb(B8)
    B_pad = _round_up(B8, TB)
    if B_pad == B:
        xp = x  # no extra HBM round trip when B already tiles cleanly
    else:
        xp = jnp.zeros((B_pad, K), x.dtype).at[:B, :].set(x)

    grid = (B_pad // TB,)

    flops = 2 * B_pad * (K * H_pad + H_pad * N)
    bytes_accessed = (
        xp.size * xp.dtype.itemsize
        + w1p.size * w1p.dtype.itemsize + b1p.size * b1p.dtype.itemsize
        + w2p.size * w2p.dtype.itemsize + b2p.size * b2p.dtype.itemsize
        + B_pad * N * x.dtype.itemsize
    )

    out = pl.pallas_call(
        mlp_kernel,
        out_shape=jax.ShapeDtypeStruct((B_pad, N), x.dtype),
        grid=grid,
        in_specs=[
            pl.BlockSpec((TB, K), lambda i: (i, 0)),        # x: tiled over batch
            pl.BlockSpec((K, H_pad), lambda i: (0, 0)),     # W1: grid-invariant, VMEM-resident
            pl.BlockSpec((1, H_pad), lambda i: (0, 0)),     # b1: grid-invariant
            pl.BlockSpec((H_pad, N), lambda i: (0, 0)),     # W2: padded only along H
            pl.BlockSpec((1, N), lambda i: (0, 0)),         # b2: true width
        ],
        out_specs=pl.BlockSpec((TB, N), lambda i: (i, 0)),  # narrow output, no N padding
        compiler_params=pltpu.CompilerParams(
            dimension_semantics=("parallel",),  # shards batch tiles across TCs on v7x
        ),
        cost_estimate=pl.CostEstimate(
            flops=flops, transcendentals=0, bytes_accessed=bytes_accessed),
    )(xp, w1p, b1p, w2p, b2p)

    if B_pad != B:
        out = out[:B, :]
    return out


def reference_forward(x, w1, b1, w2, b2):
    h = jnp.maximum(
        jnp.dot(x, w1, precision=jax.lax.Precision.HIGHEST) + b1.reshape(1, -1), 0.0)
    return jnp.dot(h, w2, precision=jax.lax.Precision.HIGHEST) + b2.reshape(1, -1)


if __name__ == "__main__":
    # args.x_fdim2 = 32 (input dim), args.x_fdim1 = 64 (hidden), ipVec_dim = 16 (output)
    B, x_fdim2, x_fdim1, ipVec_dim = 4, 32, 64, 16

    key = jax.random.PRNGKey(0)
    kx, k1, kb1, k2, kb2 = jax.random.split(key, 5)

    x = jax.random.normal(kx, (B, x_fdim2), dtype=jnp.float32)

    # Deterministic synthetic parameters (uniform, roughly matching nn.Linear init scale).
    lim1 = 1.0 / (x_fdim2 ** 0.5)
    lim2 = 1.0 / (x_fdim1 ** 0.5)
    w1 = jax.random.uniform(k1, (x_fdim2, x_fdim1), minval=-lim1, maxval=lim1, dtype=jnp.float32)
    b1 = jax.random.uniform(kb1, (x_fdim1,), minval=-lim1, maxval=lim1, dtype=jnp.float32)
    w2 = jax.random.uniform(k2, (x_fdim1, ipVec_dim), minval=-lim2, maxval=lim2, dtype=jnp.float32)
    b2 = jax.random.uniform(kb2, (ipVec_dim,), minval=-lim2, maxval=lim2, dtype=jnp.float32)

    # One-time parameter prep (padding hoisted out of the forward). f32 for exact parity;
    # use param_dtype=jnp.bfloat16 on v6e/v7x for MXU-native matmuls (loosens tolerance).
    w1p, b1p, w2p, b2p = prepare_params(w1, b1, w2, b2, param_dtype=jnp.float32)

    out = simple_net2_forward(x, w1p, b1p, w2p, b2p)
    out = jax.block_until_ready(out)

    ref = reference_forward(x, w1, b1, w2, b2)
    assert out.shape == (B, ipVec_dim), f"bad shape {out.shape}"
    assert jnp.allclose(out, ref, atol=1e-4, rtol=1e-4), "Pallas output mismatch vs reference"

    print("KERNEL_OK")
</pallas_src>

<mosaic_0001>
module attributes {stable_mosaic.version = 11 : i64} {
  func.func @mlp_kernel(%arg0: i32, %arg1: memref<8x32xf32, #tpu.memory_space<vmem>>, %arg2: memref<32x128xf32, #tpu.memory_space<vmem>>, %arg3: memref<1x128xf32, #tpu.memory_space<vmem>>, %arg4: memref<128x16xf32, #tpu.memory_space<vmem>>, %arg5: memref<1x16xf32, #tpu.memory_space<vmem>>, %arg6: memref<8x16xf32, #tpu.memory_space<vmem>>) attributes {dimension_semantics = [#tpu.dimension_semantics<parallel>], iteration_bounds = array<i64: 1>, scalar_prefetch = 0 : i64, scratch_operands = 0 : i64, tpu.core_type = #tpu.core_type<tc>, window_params = [{transform_indices = @transform_0, window_bounds = array<i64: 8, 32>}, {pipeline_mode = #tpu.pipeline_mode<synchronous>, transform_indices = @transform_1, window_bounds = array<i64: 32, 128>}, {pipeline_mode = #tpu.pipeline_mode<synchronous>, transform_indices = @transform_2, window_bounds = array<i64: 1, 128>}, {pipeline_mode = #tpu.pipeline_mode<synchronous>, transform_indices = @transform_3, window_bounds = array<i64: 128, 16>}, {pipeline_mode = #tpu.pipeline_mode<synchronous>, transform_indices = @transform_4, window_bounds = array<i64: 1, 16>}, {transform_indices = @transform_5, window_bounds = array<i64: 8, 16>}]} {
    %c0 = arith.constant 0 : index
    %c0_0 = arith.constant 0 : index
    %0 = vector.load %arg1[%c0, %c0_0] : memref<8x32xf32, #tpu.memory_space<vmem>>, vector<8x32xf32>
    %c0_1 = arith.constant 0 : index
    %c0_2 = arith.constant 0 : index
    %1 = vector.load %arg2[%c0_1, %c0_2] : memref<32x128xf32, #tpu.memory_space<vmem>>, vector<32x128xf32>
    %cst = arith.constant dense<0.000000e+00> : vector<8x128xf32>
    %2 = tpu.matmul %0, %1, %cst {dimension_numbers = #tpu.dot_dimension_numbers<[1], [0], [0], [1], [0, 0, 1, 1], [], []>} : vector<8x32xf32>, vector<32x128xf32>, vector<8x128xf32> -> vector<8x128xf32>
    %c0_3 = arith.constant 0 : index
    %c0_4 = arith.constant 0 : index
    %3 = vector.load %arg3[%c0_3, %c0_4] : memref<1x128xf32, #tpu.memory_space<vmem>>, vector<1x128xf32>
    %4 = vector.broadcast %3 : vector<1x128xf32> to vector<8x128xf32>
    %5 = arith.addf %2, %4 : vector<8x128xf32>
    %cst_5 = arith.constant 0.000000e+00 : f32
    %6 = vector.broadcast %cst_5 : f32 to vector<8x128xf32>
    %7 = arith.maximumf %5, %6 : vector<8x128xf32>
    %c0_6 = arith.constant 0 : index
    %c0_7 = arith.constant 0 : index
    %8 = vector.load %arg4[%c0_6, %c0_7] : memref<128x16xf32, #tpu.memory_space<vmem>>, vector<128x16xf32>
    %cst_8 = arith.constant dense<0.000000e+00> : vector<8x16xf32>
    %9 = tpu.matmul %7, %8, %cst_8 {dimension_numbers = #tpu.dot_dimension_numbers<[1], [0], [0], [1], [0, 0, 1, 1], [], []>} : vector<8x128xf32>, vector<128x16xf32>, vector<8x16xf32> -> vector<8x16xf32>
    %c0_9 = arith.constant 0 : index
    %c0_10 = arith.constant 0 : index
    %10 = vector.load %arg5[%c0_9, %c0_10] : memref<1x16xf32, #tpu.memory_space<vmem>>, vector<1x16xf32>
    %11 = vector.broadcast %10 : vector<1x16xf32> to vector<8x16xf32>
    %12 = arith.addf %9, %11 : vector<8x16xf32>
    %c0_11 = arith.constant 0 : index
    %c0_12 = arith.constant 0 : index
    %13 = vector.load %arg6[%c0_11, %c0_12] : memref<8x16xf32, #tpu.memory_space<vmem>>, vector<8x16xf32>
    tpu.vector_store %arg6[%c0_11, %c0_12], %12 {strides = array<i32>} : memref<8x16xf32, #tpu.memory_space<vmem>>, vector<8x16xf32>,
    return
  }
  func.func @transform_0(%arg0: i32) -> (i32, i32) {
    %c0_i32 = arith.constant 0 : i32
    %c0_i32_0 = arith.constant 0 : i32
    return %arg0, %c0_i32 : i32, i32
  }
  func.func @transform_1(%arg0: i32) -> (i32, i32) {
    %c0_i32 = arith.constant 0 : i32
    %c0_i32_0 = arith.constant 0 : i32
    %c0_i32_1 = arith.constant 0 : i32
    return %c0_i32, %c0_i32_0 : i32, i32
  }
  func.func @transform_2(%arg0: i32) -> (i32, i32) {
    %c0_i32 = arith.constant 0 : i32
    %c0_i32_0 = arith.constant 0 : i32
    %c0_i32_1 = arith.constant 0 : i32
    return %c0_i32, %c0_i32_0 : i32, i32
  }
  func.func @transform_3(%arg0: i32) -> (i32, i32) {
    %c0_i32 = arith.constant 0 : i32
    %c0_i32_0 = arith.constant 0 : i32
    %c0_i32_1 = arith.constant 0 : i32
    return %c0_i32, %c0_i32_0 : i32, i32
  }
  func.func @transform_4(%arg0: i32) -> (i32, i32) {
    %c0_i32 = arith.constant 0 : i32
    %c0_i32_0 = arith.constant 0 : i32
    %c0_i32_1 = arith.constant 0 : i32
    return %c0_i32, %c0_i32_0 : i32, i32
  }
  func.func @transform_5(%arg0: i32) -> (i32, i32) {
    %c0_i32 = arith.constant 0 : i32
    %c0_i32_0 = arith.constant 0 : i32
    return %arg0, %c0_i32 : i32, i32
  }
}

</mosaic_0001>

<llo_original>
// kernel: simple_net2_forward.1
$region0: #{simple_net2_forward.1}
  #allocation0 [shape = 'u32[]', space=smem, size = 0x4, offset = 0x4, fixed_abs, tag = 'smem constant byte address 0x4 - core index']
  #allocation1 [shape = 'u32[144,128]{1,0:T(1,128)}', space=vmem, size = 0x12000, scoped, tag = 'internal scratch']
  %s0 = inlined_call_operand.vmem [shape: f32[8,32], index: 0, kind: input, shape index: {}]
  %s1 = inlined_call_operand.vmem [shape: f32[32,128], index: 1, kind: input, shape index: {}]
  %s2 = inlined_call_operand.vmem [shape: f32[1,128], index: 2, kind: input, shape index: {}]
  %s3 = inlined_call_operand.vmem [shape: f32[128,16], index: 3, kind: input, shape index: {}]
  %s4 = inlined_call_operand.vmem [shape: f32[1,16], index: 4, kind: input, shape index: {}]
  %s5 = inlined_call_operand.vmem [shape: f32[8,16], index: 5, kind: output, shape index: {}]
  %s6 = sld [smem:[#allocation0]]
  $region30: #{simple_net2_forward.1} parent=0
    _
  %s8 = ssub.s32 1, %s6
  %s9 = scalar_select 0, %s8, %s6
  // Predicated region
  $region2: #{simple_net2_forward.1} parent=0 // pred_check
    _
  $region3: #{simple_net2_forward.1} parent=0 // pred_check_branch
    %11 = sbr.rel (0) target = $region5
  $region4: #{simple_net2_forward.1} parent=0 // pred_region
    _
  $region5: #{simple_net2_forward.1} parent=0 // pred_fallthru
    _
  // Predicated region
  $region6: #{simple_net2_forward.1} parent=0 // pred_check
    _
  $region7: #{simple_net2_forward.1} parent=0 // pred_check_branch
    %13 = sbr.rel (0) target = $region9
  $region8: #{simple_net2_forward.1} parent=0 // pred_region
    _
  $region9: #{simple_net2_forward.1} parent=0 // pred_fallthru
    _
  // Predicated region
  $region10: #{simple_net2_forward.1} parent=0 // pred_check
    _
  $region11: #{simple_net2_forward.1} parent=0 // pred_check_branch
    %15 = sbr.rel (0) target = $region13
  $region12: #{simple_net2_forward.1} parent=0 // pred_region
    _
  $region13: #{simple_net2_forward.1} parent=0 // pred_fallthru
    _
  // Predicated region
  $region14: #{simple_net2_forward.1} parent=0 // pred_check
    _
  $region15: #{simple_net2_forward.1} parent=0 // pred_check_branch
    %17 = sbr.rel (0) target = $region17
  $region16: #{simple_net2_forward.1} parent=0 // pred_region
    _
  $region17: #{simple_net2_forward.1} parent=0 // pred_fallthru
    _
  // Predicated region
  $region18: #{simple_net2_forward.1} parent=0 // pred_check
    _
  $region19: #{simple_net2_forward.1} parent=0 // pred_check_branch
    %19 = sbr.rel (0) target = $region21
  $region20: #{simple_net2_forward.1} parent=0 // pred_region
    _
  $region21: #{simple_net2_forward.1} parent=0 // pred_fallthru
    _
  %v20 = vld [vmem:[%s0] sm:$0xff]
  %v21 = vld [vmem:[%s1] sm:$0xff]
  %v22 = vld [vmem:[%s1 + $0x8] sm:$0xff]
  %v23 = vld [vmem:[%s1 + $0x10] sm:$0xff]
  %v24 = vld [vmem:[%s1 + $0x18] sm:$0xff]
  %v25 = vld [vmem:[%s2] sm:$0x1]
  %v27 = vlaneseq
  %v28 = vshrl.u32 %v27, 7
  %v29 = vsub.s32 0, %v28
  %v30 = vrot.slane %v25, %v29
  %vm32 = vcmask 261120
  %v34 = vsel %vm32, %v20, 0
  %36 = vmatprep.subr.mxu0 0.0
  %37 = vmatpush1.msra.mxu0 0.0
  %38 = vmatprep.subr.mxu0 0.0
  %39 = vmatpush1.msra.mxu0 0.0
  %40 = vmatprep.subr.mxu0 0.0
  %41 = vmatpush1.msra.mxu0 0.0
  %42 = vmatprep.subr.mxu0 0.0
  %43 = vmatpush1.msra.mxu0 0.0
  %44 = vmatprep.subr.mxu0 0.0
  %45 = vmatpush1.msra.mxu0 0.0
  %46 = vmatprep.subr.mxu0 0.0
  %47 = vmatpush1.msra.mxu0 0.0
  %48 = vmatprep.subr.mxu0 0.0
  %49 = vmatpush1.msra.mxu0 0.0
  %50 = vmatprep.subr.mxu0 0.0
  %51 = vmatpush1.msra.mxu0 0.0
  %52 = vmatprep.subr.mxu0 0.0
  %53 = vmatpush1.msra.mxu0 0.0
  %54 = vmatprep.subr.mxu0 0.0
  %55 = vmatpush1.msra.mxu0 0.0
  %56 = vmatprep.subr.mxu0 0.0
  %57 = vmatpush1.msra.mxu0 0.0
  %58 = vmatprep.subr.mxu0 0.0
  %59 = vmatpush1.msra.mxu0 0.0
  %60 = vmatprep.subr.mxu0 0.0
  %61 = vmatpush1.msra.mxu0 %v24
  %62 = vmatprep.subr.mxu0 0.0
  %63 = vmatpush1.msra.mxu0 %v23
  %64 = vmatprep.subr.mxu0 0.0
  %65 = vmatpush1.msra.mxu0 %v22
  %66 = vmatprep.subr.mxu0 0.0
  %67 = vmatpush1.msra.mxu0 %v21
  %68 = vmatprep.subr.mxu0 0.0
  %69 = vmatpush2.msra.mxu0 0.0
  %70 = vmatprep.subr.mxu0 0.0
  %71 = vmatpush2.msra.mxu0 0.0
  %72 = vmatprep.subr.mxu0 0.0
  %73 = vmatpush2.msra.mxu0 0.0
  %74 = vmatprep.subr.mxu0 0.0
  %75 = vmatpush2.msra.mxu0 0.0
  %76 = vmatprep.subr.mxu0 0.0
  %77 = vmatpush2.msra.mxu0 0.0
  %78 = vmatprep.subr.mxu0 0.0
  %79 = vmatpush2.msra.mxu0 0.0
  %80 = vmatprep.subr.mxu0 0.0
  %81 = vmatpush2.msra.mxu0 0.0
  %82 = vmatprep.subr.mxu0 0.0
  %83 = vmatpush2.msra.mxu0 0.0
  %84 = vmatprep.subr.mxu0 0.0
  %85 = vmatpush2.msra.mxu0 0.0
  %86 = vmatprep.subr.mxu0 0.0
  %87 = vmatpush2.msra.mxu0 0.0
  %88 = vmatprep.subr.mxu0 0.0
  %89 = vmatpush2.msra.mxu0 0.0
  %90 = vmatprep.subr.mxu0 0.0
  %91 = vmatpush2.msra.mxu0 0.0
  %92 = vmatprep.subr.mxu0 0.0
  %93 = vmatpush2.msra.mxu0 0.0
  %94 = vmatprep.subr.mxu0 0.0
  %95 = vmatpush2.msra.mxu0 0.0
  %96 = vmatprep.subr.mxu0 0.0
  %97 = vmatpush2.msra.mxu0 0.0
  %98 = vmatprep.subr.mxu0 0.0
  %99 = vmatpush2.msra.mxu0 0.0
  %100 = vmatprep.mubr.f32.mxu0 0.0
  %101 = vmatmul.mubr.f32.gmra.mxu0 %v34
  %v102 = vpop.f32.mrf.mxu0
  %v103 = vadd.f32 %v30, %v102
  %v104 = vpop.f32.mrf.mxu0
  %105 = vdwg.mxu0
  %v106 = vmax.f32 %v103, 0.0
  %v107 = vld [vmem:[%s3] sm:$0xff]
  %v108 = vld [vmem:[%s3 + $0x8] sm:$0xff]
  %v109 = vld [vmem:[%s3 + $0x10] sm:$0xff]
  %v110 = vld [vmem:[%s3 + $0x18] sm:$0xff]
  %v111 = vld [vmem:[%s3 + $0x20] sm:$0xff]
  %v112 = vld [vmem:[%s3 + $0x28] sm:$0xff]
  %v113 = vld [vmem:[%s3 + $0x30] sm:$0xff]
  %v114 = vld [vmem:[%s3 + $0x38] sm:$0xff]
  %v115 = vld [vmem:[%s3 + $0x40] sm:$0xff]
  %v116 = vld [vmem:[%s3 + $0x48] sm:$0xff]
  %v117 = vld [vmem:[%s3 + $0x50] sm:$0xff]
  %v118 = vld [vmem:[%s3 + $0x58] sm:$0xff]
  %v119 = vld [vmem:[%s3 + $0x60] sm:$0xff]
  %v120 = vld [vmem:[%s3 + $0x68] sm:$0xff]
  %v121 = vld [vmem:[%s3 + $0x70] sm:$0xff]
  %v122 = vld [vmem:[%s3 + $0x78] sm:$0xff]
  %v123 = vld [vmem:[%s4] sm:$0x1]
  %v125 = vlaneseq
  %v126 = vshrl.u32 %v125, 7
  %v127 = vsub.s32 0, %v126
  %v128 = vrot.slane %v123, %v127
  %130 = vmatprep.subr.mxu0 0.0
  %131 = vmatpush1.msra.mxu0 %v122
  %132 = vmatprep.subr.mxu0 0.0
  %133 = vmatpush1.msra.mxu0 %v121
  %134 = vmatprep.subr.mxu0 0.0
  %135 = vmatpush1.msra.mxu0 %v120
  %136 = vmatprep.subr.mxu0 0.0
  %137 = vmatpush1.msra.mxu0 %v119
  %138 = vmatprep.subr.mxu0 0.0
  %139 = vmatpush1.msra.mxu0 %v118
  %140 = vmatprep.subr.mxu0 0.0
  %141 = vmatpush1.msra.mxu0 %v117
  %142 = vmatprep.subr.mxu0 0.0
  %143 = vmatpush1.msra.mxu0 %v116
  %144 = vmatprep.subr.mxu0 0.0
  %145 = vmatpush1.msra.mxu0 %v115
  %146 = vmatprep.subr.mxu0 0.0
  %147 = vmatpush1.msra.mxu0 %v114
  %148 = vmatprep.subr.mxu0 0.0
  %149 = vmatpush1.msra.mxu0 %v113
  %150 = vmatprep.subr.mxu0 0.0
  %151 = vmatpush1.msra.mxu0 %v112
  %152 = vmatprep.subr.mxu0 0.0
  %153 = vmatpush1.msra.mxu0 %v111
  %154 = vmatprep.subr.mxu0 0.0
  %155 = vmatpush1.msra.mxu0 %v110
  %156 = vmatprep.subr.mxu0 0.0
  %157 = vmatpush1.msra.mxu0 %v109
  %158 = vmatprep.subr.mxu0 0.0
  %159 = vmatpush1.msra.mxu0 %v108
  %160 = vmatprep.subr.mxu0 0.0
  %161 = vmatpush1.msra.mxu0 %v107
  %162 = vmatprep.subr.mxu0 0.0
  %163 = vmatpush2.msra.mxu0 0.0
  %164 = vmatprep.subr.mxu0 0.0
  %165 = vmatpush2.msra.mxu0 0.0
  %166 = vmatprep.subr.mxu0 0.0
  %167 = vmatpush2.msra.mxu0 0.0
  %168 = vmatprep.subr.mxu0 0.0
  %169 = vmatpush2.msra.mxu0 0.0
  %170 = vmatprep.subr.mxu0 0.0
  %171 = vmatpush2.msra.mxu0 0.0
  %172 = vmatprep.subr.mxu0 0.0
  %173 = vmatpush2.msra.mxu0 0.0
  %174 = vmatprep.subr.mxu0 0.0
  %175 = vmatpush2.msra.mxu0 0.0
  %176 = vmatprep.subr.mxu0 0.0
  %177 = vmatpush2.msra.mxu0 0.0
  %178 = vmatprep.subr.mxu0 0.0
  %179 = vmatpush2.msra.mxu0 0.0
  %180 = vmatprep.subr.mxu0 0.0
  %181 = vmatpush2.msra.mxu0 0.0
  %182 = vmatprep.subr.mxu0 0.0
  %183 = vmatpush2.msra.mxu0 0.0
  %184 = vmatprep.subr.mxu0 0.0
  %185 = vmatpush2.msra.mxu0 0.0
  %186 = vmatprep.subr.mxu0 0.0
  %187 = vmatpush2.msra.mxu0 0.0
  %188 = vmatprep.subr.mxu0 0.0
  %189 = vmatpush2.msra.mxu0 0.0
  %190 = vmatprep.subr.mxu0 0.0
  %191 = vmatpush2.msra.mxu0 0.0
  %192 = vmatprep.subr.mxu0 0.0
  %193 = vmatpush2.msra.mxu0 0.0
  %194 = vmatprep.mubr.f32.mxu0 0.0
  %195 = vmatmul.mubr.f32.gmra.mxu0 %v106
  %v196 = vpop.f32.mrf.mxu0
  %v197 = vadd.f32 %v128, %v196
  %v198 = vpop.f32.mrf.mxu0
  %199 = vdwg.mxu0
  %vm200 = vcmask 130048
  %201 = vst.msk [vmem:[%s5] sm:$0xff] %vm200, %v197
  // Predicated region
  $region22: #{simple_net2_forward.1} parent=0 // pred_check
    _
  $region23: #{simple_net2_forward.1} parent=0 // pred_check_branch
    %203 = sbr.rel (0) target = $region25
  $region24: #{simple_net2_forward.1} parent=0 // pred_region
    _
  $region25: #{simple_net2_forward.1} parent=0 // pred_fallthru
    _
  // Predicated region
  $region26: #{simple_net2_forward.1} parent=0 // pred_check
    _
  $region27: #{simple_net2_forward.1} parent=0 // pred_check_branch
    %205 = sbr.rel (0) target = $region29
  $region28: #{simple_net2_forward.1} parent=0 // pred_region
    _
  $region29: #{simple_net2_forward.1} parent=0 // pred_fallthru
    _

</llo_original>
